<compile_context>
chip_gen: v7x
topology: tpu7x:2x2x1
jax: 0.10.0
libtpu: 0.0.40
codegen_flags: <defaults>
</compile_context>

<pallas_src>
import functools

import jax
import jax.numpy as jnp
import numpy as np
from jax import lax
from jax.experimental import pallas as pl
from jax.experimental.pallas import tpu as pltpu

_NEG_BIG = -1e30  # finite "minus infinity": avoids NaN from (inf - inf)


def _contrastive_kernel(q_ref, k_ref, out_ref, m_scr, l_scr, p_scr, *, n_valid, half):
    r = pl.program_id(0)
    c = pl.program_id(1)
    nc = pl.num_programs(1)
    tm = q_ref.shape[0]
    tn = k_ref.shape[0]

    # ---- init running (max, sum-exp, positive) accumulators at the first key block
    @pl.when(c == 0)
    def _():
        m_scr[...] = jnp.full_like(m_scr, _NEG_BIG)
        l_scr[...] = jnp.zeros_like(l_scr)
        p_scr[...] = jnp.zeros_like(p_scr)

    # One fused MXU contraction for the whole [zi;zj] x [zi;zj]^T tile:
    # contract dim 1 of both operands (A @ B^T without materializing a transpose).
    s = lax.dot_general(q_ref[...], k_ref[...],
                        dimension_numbers=(((1,), (1,)), ((), ())),
                        preferred_element_type=jnp.float32)          # (tm, tn) f32

    row_g = r * tm + lax.broadcasted_iota(jnp.int32, (tm, tn), 0)
    col_g = c * tn + lax.broadcasted_iota(jnp.int32, (tm, tn), 1)

    # Exclude the self-similarity diagonal and any padded key columns.
    neg = jnp.float32(_NEG_BIG)
    s_m = jnp.where((row_g == col_g) | (col_g >= n_valid), neg, s)

    # Positive logit of global row g lives in column (g + half) mod (2*half).
    # Pick it out of the (unmasked) tile -> identical rounding to the LSE path.
    partner = jnp.where(row_g < half, row_g + half, row_g - half)
    is_pos = (col_g == partner) & (row_g < n_valid)
    p_scr[...] += jnp.sum(jnp.where(is_pos, s, 0.0), axis=-1, keepdims=True)

    # Online logsumexp over this key block (single max + single sum per tile).
    t_max = jnp.max(s_m, axis=-1, keepdims=True)
    m_new = jnp.maximum(m_scr[...], t_max)
    l_scr[...] = (jnp.exp(m_scr[...] - m_new) * l_scr[...]
                  + jnp.sum(jnp.exp(s_m - m_new), axis=-1, keepdims=True))
    m_scr[...] = m_new

    # ---- finalize: per-row loss = lse - positive; zero out padded rows
    @pl.when(c == nc - 1)
    def _():
        row_l = r * tm + lax.broadcasted_iota(jnp.int32, (tm, 1), 0)
        loss = m_scr[...] + jnp.log(l_scr[...]) - p_scr[...]
        out_ref[...] = jnp.where(row_l < n_valid, loss, 0.0)


def _round_up(x, m):
    return ((x + m - 1) // m) * m


def _vmem_estimate(tm, tn, d, cs):
    return (2 * tm * d * cs          # query block (double-buffered)
            + 3 * tn * d * cs        # key block (up to triple-buffered)
            + 4 * tm * tn * 4        # S tile + exp/mask f32 temporaries
            + 5 * tm * 128 * 4       # accumulators + output block (lane-padded)
            + (2 << 20))             # slack


def _vmem_budget():
    cap = 64 * 1024 * 1024           # conservative default (v7x per-TC VMEM)
    try:
        cap = int(pltpu.get_tpu_info().vmem_capacity_bytes)
    except Exception:
        pass
    budget = min(int(cap * 0.45), 48 * 1024 * 1024)
    return budget, cap


def _choose_tiles(n_rows, d, cs, vmem_budget):
    # Row tile: up to 256, but keep >= 2 row blocks whenever possible so the
    # "parallel" row axis can shard across v7x's two TensorCores.
    tm = min(256, _round_up(max(1, (n_rows + 1) // 2), 8))
    n_pad = _round_up(n_rows, tm)
    # Key tile: largest multiple of tm that divides n_pad and fits the VMEM
    # budget (amortizes the ~0.35 us/step pipeline overhead and key re-fetch).
    tn = tm
    for mult in (4, 2, 1):
        cand = tm * mult
        if cand > n_pad or n_pad % cand != 0:
            continue
        if _vmem_estimate(tm, cand, d, cs) <= vmem_budget:
            tn = cand
            break
    return tm, tn, n_pad


def _key_block_spec(tn, d, nc):
    idx = lambda r, c: (c, 0)
    buffered = getattr(pl, "Buffered", None)
    if buffered is not None and nc >= 3:
        try:
            # Deeper key pipeline hides per-step key DMA (matters most on v5e's
            # ~820 GB/s HBM); falls back cleanly if unsupported.
            return pl.BlockSpec((tn, d), idx, pipeline_mode=buffered(3))
        except TypeError:
            pass
    return pl.BlockSpec((tn, d), idx)


def contrastive_loss(zi, zj, *, normalize=False, temperature=1.0, matmul_dtype=None):
    assert zi.ndim == 2 and zi.shape == zj.shape, "zi/zj must be (bs, d) with equal shapes"
    bs, d = zi.shape
    n = 2 * bs

    if matmul_dtype is None:
        compute_dtype = jnp.bfloat16 if zi.dtype == jnp.bfloat16 else jnp.float32
    else:
        compute_dtype = jnp.dtype(matmul_dtype)
    cs = jnp.dtype(compute_dtype).itemsize

    # Prep once per element in the wrapper (was: once per grid step in-kernel):
    # concat -> optional L2-normalize (rsqrt, F.normalize eps=1e-12) -> fold
    # 1/sqrt(T) into the operand (so Z Z^T carries 1/T) -> cast to matmul dtype.
    z = jnp.concatenate([zi, zj], axis=0).astype(jnp.float32)
    if normalize:
        ssq = jnp.sum(z * z, axis=-1, keepdims=True)
        z = z * lax.rsqrt(jnp.maximum(ssq, 1e-24))   # == x / max(||x||, 1e-12)
    z = z * jnp.float32(1.0 / np.sqrt(temperature))
    z = z.astype(compute_dtype)

    budget, cap = _vmem_budget()
    tm, tn, n_pad = _choose_tiles(n, d, cs, budget)
    if n_pad > n:
        z = jnp.pad(z, ((0, n_pad - n), (0, 0)))

    nr, nc = n_pad // tm, n_pad // tn
    vmem_limit = min(int(cap * 0.9), max(_vmem_estimate(tm, tn, d, cs), 32 * 1024 * 1024))

    cost = pl.CostEstimate(
        flops=2 * n_pad * n_pad * d,
        transcendentals=n_pad * n_pad,
        bytes_accessed=(nr + 1) * n_pad * d * cs + n_pad * 4,
    )

    kernel = functools.partial(_contrastive_kernel, n_valid=n, half=bs)

    per_row = pl.pallas_call(
        kernel,
        out_shape=jax.ShapeDtypeStruct((n_pad, 1), jnp.float32),
        grid_spec=pltpu.PrefetchScalarGridSpec(
            num_scalar_prefetch=0,
            grid=(nr, nc),
            in_specs=[
                pl.BlockSpec((tm, d), lambda r, c: (r, 0)),   # query rows of [zi;zj]
                _key_block_spec(tn, d, nc),                    # key rows of [zi;zj]
            ],
            out_specs=pl.BlockSpec((tm, 1), lambda r, c: (r, 0)),
            scratch_shapes=[pltpu.VMEM((tm, 1), jnp.float32)] * 3,  # m, l, pos
        ),
        compiler_params=pltpu.CompilerParams(
            dimension_semantics=("parallel", "arbitrary"),
            vmem_limit_bytes=vmem_limit,
        ),
        cost_estimate=cost,
    )(z, z)

    return jnp.sum(per_row) / jnp.float32(n)


def _reference_loss_np(zi, zj, normalize=False, temperature=1.0):
    """Direct numpy transliteration of the PyTorch forward (for verification)."""
    zi = np.asarray(zi, dtype=np.float64)
    zj = np.asarray(zj, dtype=np.float64)
    bs = zi.shape[0]
    if normalize:
        zi = zi / np.maximum(np.linalg.norm(zi, axis=-1, keepdims=True), 1e-12)
        zj = zj / np.maximum(np.linalg.norm(zj, axis=-1, keepdims=True), 1e-12)
    ii = zi @ zi.T / temperature
    ij = zi @ zj.T / temperature
    ji = zj @ zi.T / temperature
    jj = zj @ zj.T / temperature
    mask = ~np.eye(bs, dtype=bool)
    pos = np.concatenate([np.diag(ij), np.diag(ji)])[:, None]
    off = lambda m: m[mask].reshape(bs, bs - 1)
    neg_i = np.concatenate([off(ii), off(ij)], axis=1)
    neg_j = np.concatenate([off(ji), off(jj)], axis=1)
    neg = np.concatenate([neg_i, neg_j], axis=0)
    logits = np.concatenate([pos, neg], axis=1)
    m = logits.max(axis=1, keepdims=True)
    lse = np.log(np.exp(logits - m).sum(axis=1)) + m[:, 0]
    return float(np.mean(lse - logits[:, 0]))


if __name__ == "__main__":
    key = jax.random.PRNGKey(0)
    k1, k2, k3, k4 = jax.random.split(key, 4)

    # Module defaults: normalize=False, temperature=1.0.
    bs, d = 8, 32
    zi = jax.random.normal(k1, (bs, d), dtype=jnp.float32)
    zj = jax.random.normal(k2, (bs, d), dtype=jnp.float32)
    loss = jax.block_until_ready(contrastive_loss(zi, zj, normalize=False, temperature=1.0))
    ref = _reference_loss_np(zi, zj, normalize=False, temperature=1.0)
    assert np.allclose(float(loss), ref, rtol=1e-4, atol=1e-5), (float(loss), ref)

    # normalize=True with a non-trivial temperature.
    loss_n = jax.block_until_ready(contrastive_loss(zi, zj, normalize=True, temperature=0.5))
    ref_n = _reference_loss_np(zi, zj, normalize=True, temperature=0.5)
    assert np.allclose(float(loss_n), ref_n, rtol=1e-4, atol=1e-5), (float(loss_n), ref_n)

    # Non-tile-aligned batch exercises the pad + mask path (2*bs = 40 -> padded to 48).
    bs2, d2 = 20, 32
    zi2 = jax.random.normal(k3, (bs2, d2), dtype=jnp.float32)
    zj2 = jax.random.normal(k4, (bs2, d2), dtype=jnp.float32)
    loss_p = jax.block_until_ready(contrastive_loss(zi2, zj2, normalize=True, temperature=0.5))
    ref_p = _reference_loss_np(zi2, zj2, normalize=True, temperature=0.5)
    assert np.allclose(float(loss_p), ref_p, rtol=1e-4, atol=1e-5), (float(loss_p), ref_p)

    print("KERNEL_OK")
</pallas_src>

<mosaic_0001>
module attributes {stable_mosaic.version = 11 : i64} {
  func.func @_contrastive_kernel(%arg0: i32, %arg1: i32, %arg2: memref<8x32xf32, #tpu.memory_space<vmem>>, %arg3: memref<16x32xf32, #tpu.memory_space<vmem>>, %arg4: memref<8x1xf32, #tpu.memory_space<vmem>>, %arg5: memref<8x1xf32, #tpu.memory_space<vmem>>, %arg6: memref<8x1xf32, #tpu.memory_space<vmem>>, %arg7: memref<8x1xf32, #tpu.memory_space<vmem>>) attributes {dimension_semantics = [#tpu.dimension_semantics<parallel>, #tpu.dimension_semantics<arbitrary>], iteration_bounds = array<i64: 2, 1>, scalar_prefetch = 0 : i64, scratch_operands = 3 : i64, tpu.core_type = #tpu.core_type<tc>, window_params = [{transform_indices = @transform_0, window_bounds = array<i64: 8, 32>}, {transform_indices = @transform_1, window_bounds = array<i64: 16, 32>}, {transform_indices = @transform_2, window_bounds = array<i64: 8, 1>}]} {
    %c0_i32 = arith.constant 0 : i32
    %0 = arith.cmpi eq, %arg1, %c0_i32 : i32
    %1 = arith.extui %0 : i1 to i32
    %c0_i32_0 = arith.constant 0 : i32
    %2 = arith.cmpi ne, %1, %c0_i32_0 : i32
    scf.if %2 {
      %cst_30 = arith.constant -1.000000e+30 : f32
      %58 = vector.broadcast %cst_30 : f32 to vector<8x1xf32>
      %c0_31 = arith.constant 0 : index
      %c0_32 = arith.constant 0 : index
      %59 = vector.load %arg5[%c0_31, %c0_32] : memref<8x1xf32, #tpu.memory_space<vmem>>, vector<8x1xf32>
      tpu.vector_store %arg5[%c0_31, %c0_32], %58 {strides = array<i32>} : memref<8x1xf32, #tpu.memory_space<vmem>>, vector<8x1xf32>,
      %cst_33 = arith.constant 0.000000e+00 : f32
      %60 = vector.broadcast %cst_33 : f32 to vector<8x1xf32>
      %c0_34 = arith.constant 0 : index
      %c0_35 = arith.constant 0 : index
      %61 = vector.load %arg6[%c0_34, %c0_35] : memref<8x1xf32, #tpu.memory_space<vmem>>, vector<8x1xf32>
      tpu.vector_store %arg6[%c0_34, %c0_35], %60 {strides = array<i32>} : memref<8x1xf32, #tpu.memory_space<vmem>>, vector<8x1xf32>,
      %cst_36 = arith.constant 0.000000e+00 : f32
      %62 = vector.broadcast %cst_36 : f32 to vector<8x1xf32>
      %c0_37 = arith.constant 0 : index
      %c0_38 = arith.constant 0 : index
      %63 = vector.load %arg7[%c0_37, %c0_38] : memref<8x1xf32, #tpu.memory_space<vmem>>, vector<8x1xf32>
      tpu.vector_store %arg7[%c0_37, %c0_38], %62 {strides = array<i32>} : memref<8x1xf32, #tpu.memory_space<vmem>>, vector<8x1xf32>,
    } else {
    }
    %c0 = arith.constant 0 : index
    %c0_1 = arith.constant 0 : index
    %3 = vector.load %arg2[%c0, %c0_1] : memref<8x32xf32, #tpu.memory_space<vmem>>, vector<8x32xf32>
    %c0_2 = arith.constant 0 : index
    %c0_3 = arith.constant 0 : index
    %4 = vector.load %arg3[%c0_2, %c0_3] : memref<16x32xf32, #tpu.memory_space<vmem>>, vector<16x32xf32>
    %cst = arith.constant dense<0.000000e+00> : vector<8x16xf32>
    %5 = tpu.matmul %3, %4, %cst {dimension_numbers = #tpu.dot_dimension_numbers<[1], [1], [0], [0], [0, 0, 1, 0], [], []>} : vector<8x32xf32>, vector<16x32xf32>, vector<8x16xf32> -> vector<8x16xf32>
    %c8_i32 = arith.constant 8 : i32
    %6 = arith.muli %arg0, %c8_i32 : i32
    %7 = tpu.iota {dimensions = array<i32: 0>} : vector<8x16xi32>
    %8 = vector.broadcast %6 : i32 to vector<8x16xi32>
    %9 = arith.addi %8, %7 : vector<8x16xi32>
    %c16_i32 = arith.constant 16 : i32
    %10 = arith.muli %arg1, %c16_i32 : i32
    %11 = tpu.iota {dimensions = array<i32: 1>} : vector<8x16xi32>
    %12 = vector.broadcast %10 : i32 to vector<8x16xi32>
    %13 = arith.addi %12, %11 : vector<8x16xi32>
    %14 = arith.cmpi eq, %9, %13 : vector<8x16xi32>
    %c16_i32_4 = arith.constant 16 : i32
    %15 = vector.broadcast %c16_i32_4 : i32 to vector<8x16xi32>
    %16 = arith.cmpi sge, %13, %15 : vector<8x16xi32>
    %17 = arith.ori %14, %16 : vector<8x16xi1>
    %cst_5 = arith.constant -1.000000e+30 : f32
    %18 = vector.broadcast %cst_5 : f32 to vector<8x16xf32>
    %19 = arith.select %17, %18, %5 : vector<8x16xi1>, vector<8x16xf32>
    %c8_i32_6 = arith.constant 8 : i32
    %20 = vector.broadcast %c8_i32_6 : i32 to vector<8x16xi32>
    %21 = arith.cmpi slt, %9, %20 : vector<8x16xi32>
    %c8_i32_7 = arith.constant 8 : i32
    %22 = vector.broadcast %c8_i32_7 : i32 to vector<8x16xi32>
    %23 = arith.addi %9, %22 : vector<8x16xi32>
    %c8_i32_8 = arith.constant 8 : i32
    %24 = vector.broadcast %c8_i32_8 : i32 to vector<8x16xi32>
    %25 = arith.subi %9, %24 : vector<8x16xi32>
    %26 = arith.select %21, %23, %25 : vector<8x16xi1>, vector<8x16xi32>
    %27 = arith.cmpi eq, %13, %26 : vector<8x16xi32>
    %c16_i32_9 = arith.constant 16 : i32
    %28 = vector.broadcast %c16_i32_9 : i32 to vector<8x16xi32>
    %29 = arith.cmpi slt, %9, %28 : vector<8x16xi32>
    %30 = arith.andi %27, %29 : vector<8x16xi1>
    %c0_10 = arith.constant 0 : index
    %c0_11 = arith.constant 0 : index
    %31 = vector.load %arg7[%c0_10, %c0_11] : memref<8x1xf32, #tpu.memory_space<vmem>>, vector<8x1xf32>
    %cst_12 = arith.constant 0.000000e+00 : f32
    %32 = vector.broadcast %cst_12 : f32 to vector<8x16xf32>
    %33 = arith.select %30, %5, %32 : vector<8x16xi1>, vector<8x16xf32>
    %cst_13 = arith.constant dense<0.000000e+00> : vector<8xf32>
    %34 = vector.multi_reduction <add>, %33, %cst_13 [1] : vector<8x16xf32> to vector<8xf32>
    %35 = vector.shape_cast %34 : vector<8xf32> to vector<8x1xf32>
    %36 = arith.addf %31, %35 : vector<8x1xf32>
    %c0_14 = arith.constant 0 : index
    %c0_15 = arith.constant 0 : index
    %37 = vector.load %arg7[%c0_14, %c0_15] : memref<8x1xf32, #tpu.memory_space<vmem>>, vector<8x1xf32>
    tpu.vector_store %arg7[%c0_14, %c0_15], %36 {strides = array<i32>} : memref<8x1xf32, #tpu.memory_space<vmem>>, vector<8x1xf32>,
    %cst_16 = arith.constant dense<0xFF800000> : vector<8xf32>
    %38 = vector.multi_reduction <maximumf>, %19, %cst_16 [1] : vector<8x16xf32> to vector<8xf32>
    %39 = vector.shape_cast %38 : vector<8xf32> to vector<8x1xf32>
    %c0_17 = arith.constant 0 : index
    %c0_18 = arith.constant 0 : index
    %40 = vector.load %arg5[%c0_17, %c0_18] : memref<8x1xf32, #tpu.memory_space<vmem>>, vector<8x1xf32>
    %41 = arith.maximumf %40, %39 : vector<8x1xf32>
    %c0_19 = arith.constant 0 : index
    %c0_20 = arith.constant 0 : index
    %42 = vector.load %arg5[%c0_19, %c0_20] : memref<8x1xf32, #tpu.memory_space<vmem>>, vector<8x1xf32>
    %43 = arith.subf %42, %41 : vector<8x1xf32>
    %44 = math.exp %43 : vector<8x1xf32>
    %c0_21 = arith.constant 0 : index
    %c0_22 = arith.constant 0 : index
    %45 = vector.load %arg6[%c0_21, %c0_22] : memref<8x1xf32, #tpu.memory_space<vmem>>, vector<8x1xf32>
    %46 = arith.mulf %44, %45 : vector<8x1xf32>
    %47 = vector.broadcast %41 : vector<8x1xf32> to vector<8x16xf32>
    %48 = arith.subf %19, %47 : vector<8x16xf32>
    %49 = math.exp %48 : vector<8x16xf32>
    %cst_23 = arith.constant dense<0.000000e+00> : vector<8xf32>
    %50 = vector.multi_reduction <add>, %49, %cst_23 [1] : vector<8x16xf32> to vector<8xf32>
    %51 = vector.shape_cast %50 : vector<8xf32> to vector<8x1xf32>
    %52 = arith.addf %46, %51 : vector<8x1xf32>
    %c0_24 = arith.constant 0 : index
    %c0_25 = arith.constant 0 : index
    %53 = vector.load %arg6[%c0_24, %c0_25] : memref<8x1xf32, #tpu.memory_space<vmem>>, vector<8x1xf32>
    tpu.vector_store %arg6[%c0_24, %c0_25], %52 {strides = array<i32>} : memref<8x1xf32, #tpu.memory_space<vmem>>, vector<8x1xf32>,
    %c0_26 = arith.constant 0 : index
    %c0_27 = arith.constant 0 : index
    %54 = vector.load %arg5[%c0_26, %c0_27] : memref<8x1xf32, #tpu.memory_space<vmem>>, vector<8x1xf32>
    tpu.vector_store %arg5[%c0_26, %c0_27], %41 {strides = array<i32>} : memref<8x1xf32, #tpu.memory_space<vmem>>, vector<8x1xf32>,
    %c0_i32_28 = arith.constant 0 : i32
    %55 = arith.cmpi eq, %arg1, %c0_i32_28 : i32
    %56 = arith.extui %55 : i1 to i32
    %c0_i32_29 = arith.constant 0 : i32
    %57 = arith.cmpi ne, %56, %c0_i32_29 : i32
    scf.if %57 {
      %c8_i32_30 = arith.constant 8 : i32
      %58 = arith.muli %arg0, %c8_i32_30 : i32
      %59 = tpu.iota {dimensions = array<i32: 0>} : vector<8x1xi32>
      %60 = vector.broadcast %58 : i32 to vector<8x1xi32>
      %61 = arith.addi %60, %59 : vector<8x1xi32>
      %c0_31 = arith.constant 0 : index
      %c0_32 = arith.constant 0 : index
      %62 = vector.load %arg5[%c0_31, %c0_32] : memref<8x1xf32, #tpu.memory_space<vmem>>, vector<8x1xf32>
      %c0_33 = arith.constant 0 : index
      %c0_34 = arith.constant 0 : index
      %63 = vector.load %arg6[%c0_33, %c0_34] : memref<8x1xf32, #tpu.memory_space<vmem>>, vector<8x1xf32>
      %64 = math.log %63 : vector<8x1xf32>
      %65 = arith.addf %62, %64 : vector<8x1xf32>
      %c0_35 = arith.constant 0 : index
      %c0_36 = arith.constant 0 : index
      %66 = vector.load %arg7[%c0_35, %c0_36] : memref<8x1xf32, #tpu.memory_space<vmem>>, vector<8x1xf32>
      %67 = arith.subf %65, %66 : vector<8x1xf32>
      %c16_i32_37 = arith.constant 16 : i32
      %68 = vector.broadcast %c16_i32_37 : i32 to vector<8x1xi32>
      %69 = arith.cmpi slt, %61, %68 : vector<8x1xi32>
      %cst_38 = arith.constant 0.000000e+00 : f32
      %70 = vector.broadcast %cst_38 : f32 to vector<8x1xf32>
      %71 = arith.select %69, %67, %70 : vector<8x1xi1>, vector<8x1xf32>
      %c0_39 = arith.constant 0 : index
      %c0_40 = arith.constant 0 : index
      %72 = vector.load %arg4[%c0_39, %c0_40] : memref<8x1xf32, #tpu.memory_space<vmem>>, vector<8x1xf32>
      tpu.vector_store %arg4[%c0_39, %c0_40], %71 {strides = array<i32>} : memref<8x1xf32, #tpu.memory_space<vmem>>, vector<8x1xf32>,
    } else {
    }
    return
  }
  func.func @transform_0(%arg0: i32, %arg1: i32) -> (i32, i32) {
    %c0_i32 = arith.constant 0 : i32
    %c0_i32_0 = arith.constant 0 : i32
    return %arg0, %c0_i32 : i32, i32
  }
  func.func @transform_1(%arg0: i32, %arg1: i32) -> (i32, i32) {
    %c0_i32 = arith.constant 0 : i32
    %c0_i32_0 = arith.constant 0 : i32
    return %arg1, %c0_i32 : i32, i32
  }
  func.func @transform_2(%arg0: i32, %arg1: i32) -> (i32, i32) {
    %c0_i32 = arith.constant 0 : i32
    %c0_i32_0 = arith.constant 0 : i32
    return %arg0, %c0_i32 : i32, i32
  }
}

</mosaic_0001>

<llo_original>
// kernel: tpu_custom_call.1
$region0: #{tpu_custom_call.1}
  #allocation0 [shape = 'u32[]', space=smem, size = 0x4, offset = 0x4, fixed_abs, tag = 'smem constant byte address 0x4 - core index']
  #allocation1 [shape = 'u32[144,128]{1,0:T(1,128)}', space=vmem, size = 0x12000, scoped, tag = 'internal scratch']
  #allocation2 [shape = 'f32[8,1]{1,0:T(8,128)}', space=vmem, size = 0x1000, scoped, tag = 'scratch operand']
  #allocation3 [shape = 'f32[8,1]{1,0:T(8,128)}', space=vmem, size = 0x1000, scoped, tag = 'scratch operand']
  #allocation4 [shape = 'f32[8,1]{1,0:T(8,128)}', space=vmem, size = 0x1000, scoped, tag = 'scratch operand']
  %s0 = inlined_call_operand.hbm [shape: f32[16,32], index: 0, kind: input, shape index: {}]
  %s1 = inlined_call_operand.hbm [shape: f32[16,32], index: 1, kind: input, shape index: {}]
  %s2 = inlined_call_operand.vmem [shape: f32[16,1], index: 2, kind: output, shape index: {}]
  %s3 = sld [smem:[#allocation0]]
  $region57: #{tpu_custom_call.1} parent=0
    _
  %s5 = ssub.s32 1, %s3
  %s6 = scalar_select 0, %s5, %s3
  $region1: #{tpu_custom_call.1} parent=0
    #allocation5 [shape = 'u8[8192]{0}', space=vmem, size = 0x2000, scoped, tag = 'input window, operand 0']
    #allocation6 [shape = 's32[2]{0}', space=sflag, size = 0x8, scoped, tag = 'scoped memory for tpu_custom_call.1']
    #allocation7 [shape = 'u8[8192]{0}', space=vmem, size = 0x2000, scoped, tag = 'input window, operand 1, single buffered']
    #allocation8 [shape = 's32[1]{0}', space=sflag, size = 0x4, scoped, tag = 'scoped memory for tpu_custom_call.1']
    %7 = vsyncpa [#allocation6], 0
    %s8 = scalar_lea.sflag [#allocation6], 1
    %9 = vsyncpa %s8, 0
    %10 = vsyncpa [#allocation8], 0
    loop: start=0, step=1, limit=4
    $region2: #{tpu_custom_call.1} parent=1 // loop_pre_header
      _
    $region3: #{tpu_custom_call.1} parent=1 // loop_header
      %s12 = sphi 0, %s16
      %p13 = scmp.ge.s32.totalorder %s12, 4
      %s19 = sphi 0, %s31
      %s20 = sphi 0, %s27
      %s21 = sphi 0, %s19
      %s22 = sphi 0, %s20
      %s23 = sphi 0, %s21
      %s24 = sphi 0, %s22
      %s34 = sphi 0, %s36
      %s37 = sphi 0, %s34
      %s38 = sphi 0, %s37
      %s54 = sphi 0, %s38
      %s60 = sphi 0, %s62
      %s63 = sphi 0, %s60
      %s64 = sphi 0, %s63
      %s80 = sphi 0, %s64
      %s86 = sphi 0, %s88
      %s89 = sphi 0, %s86
      %s90 = sphi 0, %s89
      %s106 = sphi 0, %s90
    $region4: #{tpu_custom_call.1} parent=1 // loop_header_branch
      %15 = sbr.rel (%p13) target = $region8
    $region5: #{tpu_custom_call.1} parent=1 // loop_body
      %s17 = ssub.s32 %s12, 1
      %s18 = ssub.s32 %s12, 2
      %s25 = sadd.s32 1, %s20
      %p26 = scmp.ge.s32.totalorder %s25, 1
      %s27 = scalar_select %p26, 0, %s25
      %s28 = sadd.s32 1, %s19
      %s29 = scalar_select %p26, %s28, %s19
      %p30 = scmp.ge.s32.totalorder %s29, 2
      %s31 = scalar_select %p30, 0, %s29
      %s32 = ssub.s32 %s19, %s31
      %p33 = scmp.eq.s32.totalorder %s32, 0
      %s35 = sadd.s32 %s34, 1
      %s36 = scalar_select %p33, %s34, %s35
      %p39 = pneg %p33
      %p40 = scmp.eq.s32.totalorder %s12, 1
      %p41 = por %p39, %p40
      %p42 = scmp.ne.s32.totalorder %s34, %s37
      %p43 = scmp.eq.s32.totalorder %s12, 0
      %p44 = por %p42, %p43
      %p45 = scmp.ne.s32.totalorder %s34, %s37
      %p46 = scmp.eq.s32.totalorder %s17, 1
      %p47 = por %p45, %p46
      %p48 = scmp.ne.s32.totalorder %s37, %s38
      %p49 = scmp.eq.s32.totalorder %s17, 0
      %p50 = por %p48, %p49
      %p51 = scmp.ne.s32.totalorder %s37, %s38
      %p52 = scmp.eq.s32.totalorder %s18, 1
      %p53 = por %p51, %p52
      %p55 = scmp.ne.s32.totalorder %s38, %s54
      %p56 = scmp.eq.s32.totalorder %s18, 0
      %p57 = por %p55, %p56
      %s58 = ssub.s32 %s20, %s27
      %p59 = scmp.eq.s32.totalorder %s58, 0
      %s61 = sadd.s32 %s60, 1
      %s62 = scalar_select %p59, %s60, %s61
      %p65 = pneg %p59
      %p66 = scmp.eq.s32.totalorder %s12, 1
      %p67 = por %p65, %p66
      %p68 = scmp.ne.s32.totalorder %s60, %s63
      %p69 = scmp.eq.s32.totalorder %s12, 0
      %p70 = por %p68, %p69
      %p71 = scmp.ne.s32.totalorder %s60, %s63
      %p72 = scmp.eq.s32.totalorder %s17, 1
      %p73 = por %p71, %p72
      %p74 = scmp.ne.s32.totalorder %s63, %s64
      %p75 = scmp.eq.s32.totalorder %s17, 0
      %p76 = por %p74, %p75
      %p77 = scmp.ne.s32.totalorder %s63, %s64
      %p78 = scmp.eq.s32.totalorder %s18, 1
      %p79 = por %p77, %p78
      %p81 = scmp.ne.s32.totalorder %s64, %s80
      %p82 = scmp.eq.s32.totalorder %s18, 0
      %p83 = por %p81, %p82
      %s84 = ssub.s32 %s19, %s31
      %p85 = scmp.eq.s32.totalorder %s84, 0
      %s87 = sadd.s32 %s86, 1
      %s88 = scalar_select %p85, %s86, %s87
      %p91 = pneg %p85
      %p92 = scmp.eq.s32.totalorder %s12, 1
      %p93 = por %p91, %p92
      %p94 = scmp.ne.s32.totalorder %s86, %s89
      %p95 = scmp.eq.s32.totalorder %s12, 0
      %p96 = por %p94, %p95
      %p97 = scmp.ne.s32.totalorder %s86, %s89
      %p98 = scmp.eq.s32.totalorder %s17, 1
      %p99 = por %p97, %p98
      %p100 = scmp.ne.s32.totalorder %s89, %s90
      %p101 = scmp.eq.s32.totalorder %s17, 0
      %p102 = por %p100, %p101
      %p103 = scmp.ne.s32.totalorder %s89, %s90
      %p104 = scmp.eq.s32.totalorder %s18, 1
      %p105 = por %p103, %p104
      %p107 = scmp.ne.s32.totalorder %s90, %s106
      %p108 = scmp.eq.s32.totalorder %s18, 0
      %p109 = por %p107, %p108
      %p110 = scmp.le.s32.totalorder 1, %s12
      %p111 = scmp.lt.s32.totalorder %s12, 3
      %p112 = pnand %p110, %p111
      %p113 = pneg %p112
      // Predicated region
      $region9: #{tpu_custom_call.1} parent=5 // pred_check
        _
      $region10: #{tpu_custom_call.1} parent=5 // pred_check_branch
        %115 = sbr.rel (%p112) target = $region12
      $region11: #{tpu_custom_call.1} parent=5 // pred_region
        %s116 = ssub.s32 %s12, 1
        // Predicated region
        $region13: #{tpu_custom_call.1} parent=11 // pred_check
          %p117 = pneg %p76
        $region14: #{tpu_custom_call.1} parent=11 // pred_check_branch
          %119 = sbr.rel (%p117) target = $region16
        $region15: #{tpu_custom_call.1} parent=11 // pred_region
          %s120 = smul.u32 2, %s22
          %s122 = ssub.s32 256, 256
          %123 = vsyncadd [#allocation8], %s122
          %s124 = smul.addr %s120, 128
          %s125 = scalar_lea.hbm %s1, %s124
          %s126 = sshll.u32 [#allocation7], 4
          %s127 = int_to_ptr.vmem [resolvable:$true] %s126
          %132 = dma.hbm_to_vmem [thread:$0]  %s125, 256, %s127, [#allocation8], 128, 128, 8
        $region16: #{tpu_custom_call.1} parent=11 // pred_fallthru
          _
      $region12: #{tpu_custom_call.1} parent=5 // pred_fallthru
        _
      %p133 = scmp.lt.s32.totalorder %s12, 2
      // Predicated region
      $region17: #{tpu_custom_call.1} parent=5 // pred_check
        %p134 = pneg %p133
      $region18: #{tpu_custom_call.1} parent=5 // pred_check_branch
        %136 = sbr.rel (%p134) target = $region20
      $region19: #{tpu_custom_call.1} parent=5 // pred_region
        // Predicated region
        $region21: #{tpu_custom_call.1} parent=19 // pred_check
          %p137 = pneg %p44
        $region22: #{tpu_custom_call.1} parent=19 // pred_check_branch
          %139 = sbr.rel (%p137) target = $region24
        $region23: #{tpu_custom_call.1} parent=19 // pred_region
          %s140 = sand.u32 %s34, 1
          %s141 = scalar_lea.sflag [#allocation6], %s140
          %s142 = sand.u32 %s34, 1
          %s143 = smul.addr %s142, 8
          %s144 = scalar_lea.vmem [#allocation5], %s143
          %s146 = ssub.s32 128, 128
          %147 = vsyncadd %s141, %s146
          %s148 = smul.addr %s19, 128
          %s149 = scalar_lea.hbm %s0, %s148
          %s151 = sshll.u32 %s144, 4
          %s152 = int_to_ptr.vmem [resolvable:$true] %s151
          %154 = dma.hbm_to_vmem [thread:$0]  %s149, 128, %s152, %s141
        $region24: #{tpu_custom_call.1} parent=19 // pred_fallthru
          _
      $region20: #{tpu_custom_call.1} parent=5 // pred_fallthru
        _
      %p155 = scmp.le.s32.totalorder 1, %s12
      %p156 = scmp.lt.s32.totalorder %s12, 3
      %p157 = pnand %p155, %p156
      %p158 = pneg %p157
      // Predicated region
      $region25: #{tpu_custom_call.1} parent=5 // pred_check
        _
      $region26: #{tpu_custom_call.1} parent=5 // pred_check_branch
        %160 = sbr.rel (%p157) target = $region28
      $region27: #{tpu_custom_call.1} parent=5 // pred_region
        %s161 = ssub.s32 %s12, 1
        %s162 = sand.u32 %s37, 1
        %s163 = scalar_lea.sflag [#allocation6], %s162
        %s164 = sand.u32 %s37, 1
        %s165 = smul.addr %s164, 8
        %s166 = scalar_lea.vmem [#allocation5], %s165
        // Predicated region
        $region29: #{tpu_custom_call.1} parent=27 // pred_check
          %p167 = pneg %p50
        $region30: #{tpu_custom_call.1} parent=27 // pred_check_branch
          %169 = sbr.rel (%p167) target = $region32
        $region31: #{tpu_custom_call.1} parent=27 // pred_region
          %170 = dma.done %s163, 128
        $region32: #{tpu_custom_call.1} parent=27 // pred_fallthru
          _
        // Predicated region
        $region33: #{tpu_custom_call.1} parent=27 // pred_check
          %p171 = pneg %p76
        $region34: #{tpu_custom_call.1} parent=27 // pred_check_branch
          %173 = sbr.rel (%p171) target = $region36
        $region35: #{tpu_custom_call.1} parent=27 // pred_region
          %174 = dma.done [#allocation8], 256
        $region36: #{tpu_custom_call.1} parent=27 // pred_fallthru
          _
        %s175 = sand.u32 %s37, 1
        %s176 = scalar_lea.sflag [#allocation6], %s175
        %s177 = sand.u32 %s37, 1
        %s178 = smul.addr %s177, 8
        %s179 = scalar_lea.vmem [#allocation5], %s178
        %p180 = pneg %p50
        %p181 = pneg %p47
        %p182 = pneg %p76
        %p183 = pneg %p73
        %p184 = pneg %p102
        %p185 = pneg %p99
        %p186 = scmp.lt.s32.totalorder %s21, 1
        %s187 = scalar_select %p186, %s21, 1
        %s188 = smul.addr %s187, 8
        %s189 = scalar_lea.vmem %s2, %s188
        %s190 = smul.u32 2, %s22
        %p191 = scmp.lt.s32.totalorder %s21, 1
        %s192 = scalar_select %p191, %s21, 1
        %s193 = smul.addr %s192, 8
        %s194 = scalar_lea.vmem %s2, %s193
        %p195 = scmp.eq.s32.totalorder %s22, 0
        // Predicated region
        $region37: #{tpu_custom_call.1} parent=27 // pred_check
          %p196 = pneg %p195
        $region38: #{tpu_custom_call.1} parent=27 // pred_check_branch
          %198 = sbr.rel (%p196) target = $region40
        $region39: #{tpu_custom_call.1} parent=27 // pred_region
          %vm199 = vcmask 7168
          %200 = vst.msk [vmem:[#allocation2] sm:$0xff] %vm199, -1e+30
          %201 = vst.msk [vmem:[#allocation3] sm:$0xff] %vm199, 0.0
          %202 = vst.msk [vmem:[#allocation4] sm:$0xff] %vm199, 0.0
        $region40: #{tpu_custom_call.1} parent=27 // pred_fallthru
          _
        %v203 = vld [vmem:[%s166] sm:$0xff]
        %v204 = vld [vmem:[#allocation7] sm:$0xff]
        %v205 = vld [vmem:[#allocation7 + $0x8] sm:$0xff]
        %vm206 = vcmask 261120
        %v208 = vsel %vm206, %v203, 0
        %v211 = vsel %vm206, %v204, 0
        %v214 = vsel %vm206, %v205, 0
        %216 = vmatprep.subr.mxu0 0.0
        %217 = vmatpush1.xpose.msra.mxu0 %v211
        %218 = vmatprep.subr.mxu0 0.0
        %219 = vmatpush1.xpose.msra.mxu0 %v214
        %220 = vmatprep.subr.mxu0 0.0
        %221 = vmatpush1.xpose.msra.mxu0 0.0
        %222 = vmatprep.subr.mxu0 0.0
        %223 = vmatpush1.xpose.msra.mxu0 0.0
        %224 = vmatprep.subr.mxu0 0.0
        %225 = vmatpush1.xpose.msra.mxu0 0.0
        %226 = vmatprep.subr.mxu0 0.0
        %227 = vmatpush1.xpose.msra.mxu0 0.0
        %228 = vmatprep.subr.mxu0 0.0
        %229 = vmatpush1.xpose.msra.mxu0 0.0
        %230 = vmatprep.subr.mxu0 0.0
        %231 = vmatpush1.xpose.msra.mxu0 0.0
        %232 = vmatprep.subr.mxu0 0.0
        %233 = vmatpush1.xpose.msra.mxu0 0.0
        %234 = vmatprep.subr.mxu0 0.0
        %235 = vmatpush1.xpose.msra.mxu0 0.0
        %236 = vmatprep.subr.mxu0 0.0
        %237 = vmatpush1.xpose.msra.mxu0 0.0
        %238 = vmatprep.subr.mxu0 0.0
        %239 = vmatpush1.xpose.msra.mxu0 0.0
        %240 = vmatprep.subr.mxu0 0.0
        %241 = vmatpush1.xpose.msra.mxu0 0.0
        %242 = vmatprep.subr.mxu0 0.0
        %243 = vmatpush1.xpose.msra.mxu0 0.0
        %244 = vmatprep.subr.mxu0 0.0
        %245 = vmatpush1.xpose.msra.mxu0 0.0
        %246 = vmatprep.subr.mxu0 0.0
        %247 = vmatpush1.xpose.msra.mxu0 0.0
        %248 = vmatprep.subr.mxu0 0.0
        %249 = vmatpush1.xpose.msra.mxu0 0.0
        %250 = vmatprep.subr.mxu0 0.0
        %251 = vmatpush1.xpose.msra.mxu0 0.0
        %252 = vmatprep.subr.mxu0 0.0
        %253 = vmatpush1.xpose.msra.mxu0 0.0
        %254 = vmatprep.subr.mxu0 0.0
        %255 = vmatpush1.xpose.msra.mxu0 0.0
        %256 = vmatprep.subr.mxu0 0.0
        %257 = vmatpush1.xpose.msra.mxu0 0.0
        %258 = vmatprep.subr.mxu0 0.0
        %259 = vmatpush1.xpose.msra.mxu0 0.0
        %260 = vmatprep.subr.mxu0 0.0
        %261 = vmatpush1.xpose.msra.mxu0 0.0
        %262 = vmatprep.subr.mxu0 0.0
        %263 = vmatpush1.xpose.msra.mxu0 0.0
        %264 = vmatprep.subr.mxu0 0.0
        %265 = vmatpush1.xpose.msra.mxu0 0.0
        %266 = vmatprep.subr.mxu0 0.0
        %267 = vmatpush1.xpose.msra.mxu0 0.0
        %268 = vmatprep.subr.mxu0 0.0
        %269 = vmatpush1.xpose.msra.mxu0 0.0
        %270 = vmatprep.subr.mxu0 0.0
        %271 = vmatpush1.xpose.msra.mxu0 0.0
        %272 = vmatprep.subr.mxu0 0.0
        %273 = vmatpush1.xpose.msra.mxu0 0.0
        %274 = vmatprep.subr.mxu0 0.0
        %275 = vmatpush1.xpose.msra.mxu0 0.0
        %276 = vmatprep.subr.mxu0 0.0
        %277 = vmatpush1.xpose.msra.mxu0 0.0
        %278 = vmatprep.subr.mxu0 0.0
        %279 = vmatpush1.xpose.msra.mxu0 0.0
        %280 = vmatprep.mubr.f32.mxu0 0.0
        %281 = vmatmul.mubr.f32.gmra.mrb[0].mxu0 %v208
        %v282 = vpop.f32.mrb[0].mxu0
        %v283 = vadd.f32 0.0, %v282
        %v284 = vpop.f32.mrb[0].mxu0
        %285 = vdwg.mxu0
        %s286 = smul.u32 %s21, 8
        %v287 = vlaneseq
        %v288 = vshrl.u32 %v287, 7
        %v289 = vstv %s286
        %v290 = vadd.s32 %v289, %v288
        %s291 = smul.u32 %s22, 16
        %v292 = vlaneseq
        %v293 = vand.u32 %v292, 127
        %v294 = vstv %s291
        %v295 = vadd.s32 %v294, %v293
        %vm296 = vcmp.eq.s32.totalorder %v290, %v295
        %vm297 = vcmp.ge.s32.totalorder %v295, 16
        %vm298 = vmor %vm296, %vm297
        %v299 = vsel %vm298, -1e+30, %v283
        %vm300 = vcmp.lt.s32.totalorder %v290, 8
        %v301 = vadd.s32 %v290, 8
        %v302 = vsub.s32 %v290, 8
        %v303 = vsel %vm300, %v301, %v302
        %vm304 = vcmp.eq.s32.totalorder %v295, %v303
        %vm305 = vcmp.lt.s32.totalorder %v290, 16
        %vm306 = vmand %vm304, %vm305
        %v307 = vld [vmem:[#allocation4] sm:$0xff]
        %v308 = vsel %vm306, %v283, 0.0
        %vm309 = vcmask 130048
        %v310 = vsel %vm309, %v308, 0.0
        %311 = vadd.xlane.f32.xlu0 %v310
        %v312 = vpop.xlane.xlu0 %311
        %v313 = vadd.f32 %v307, %v312
        %vm314 = vcmask 7168
        %315 = vst.msk [vmem:[#allocation4] sm:$0xff] %vm314, %v313
        %v316 = vsel %vm309, %v299, -inf
        %317 = vmax.xlane.f32.xlu0 %v316
        %v318 = vpop.xlane.xlu0 %317
        %v319 = vld [vmem:[#allocation2] sm:$0xff]
        %v320 = vmax.f32 %v319, %v318
        %v321 = vsub.f32 %v319, %v320
        %v322 = vmul.f32 %v321, 1.442695
        %v323 = vpow.pop %v322
        %v324 = vld [vmem:[#allocation3] sm:$0xff]
        %v325 = vmul.f32 %v323, %v324
        %327 = vset.pattern.permute.xlu0 0
        %328 = vperm.xlu0 %327, %v320
        %v329 = vpop.permute.xlu0 %328
        %v331 = vsub.f32 %v299, %v329
        %v332 = vmul.f32 %v331, 1.442695
        %v333 = vpow.pop %v332
        %v334 = vsel %vm309, %v333, 0.0
        %335 = vadd.xlane.f32.xlu0 %v334
        %v336 = vpop.xlane.xlu0 %335
        %v337 = vadd.f32 %v325, %v336
        %338 = vst.msk [vmem:[#allocation3] sm:$0xff] %vm314, %v337
        %339 = vst.msk [vmem:[#allocation2] sm:$0xff] %vm314, %v320
        // Predicated region
        $region41: #{tpu_custom_call.1} parent=27 // pred_check
          %p340 = pneg %p195
        $region42: #{tpu_custom_call.1} parent=27 // pred_check_branch
          %342 = sbr.rel (%p340) target = $region44
        $region43: #{tpu_custom_call.1} parent=27 // pred_region
          %v343 = vld [vmem:[#allocation2] sm:$0xff]
          %v344 = vld [vmem:[#allocation3] sm:$0xff]
          %v345 = vlog2.pop %v344
          %v346 = vmul.f32 %v345, 0.6931472
          %v347 = vadd.f32 %v343, %v346
          %v348 = vld [vmem:[#allocation4] sm:$0xff]
          %v349 = vsub.f32 %v347, %v348
          %v350 = vsel %vm305, %v349, 0.0
          %351 = vst.msk [vmem:[%s194] sm:$0xff] %vm314, %v350
        $region44: #{tpu_custom_call.1} parent=27 // pred_fallthru
          _
        %p352 = scmp.lt.s32.totalorder %s21, 1
        %s353 = scalar_select %p352, %s21, 1
        %s354 = smul.addr %s353, 8
        %s355 = scalar_lea.vmem %s2, %s354
        // Predicated region
        $region45: #{tpu_custom_call.1} parent=27 // pred_check
          %p356 = pneg %p99
        $region46: #{tpu_custom_call.1} parent=27 // pred_check_branch
          %358 = sbr.rel (%p356) target = $region48
        $region47: #{tpu_custom_call.1} parent=27 // pred_region
          _
        $region48: #{tpu_custom_call.1} parent=27 // pred_fallthru
          _
      $region28: #{tpu_custom_call.1} parent=5 // pred_fallthru
        _
      %p359 = scmp.le.s32.totalorder 2, %s12
      // Predicated region
      $region49: #{tpu_custom_call.1} parent=5 // pred_check
        %p360 = pneg %p359
      $region50: #{tpu_custom_call.1} parent=5 // pred_check_branch
        %362 = sbr.rel (%p360) target = $region52
      $region51: #{tpu_custom_call.1} parent=5 // pred_region
        %s363 = ssub.s32 %s12, 2
        // Predicated region
        $region53: #{tpu_custom_call.1} parent=51 // pred_check
          %p364 = pneg %p105
        $region54: #{tpu_custom_call.1} parent=51 // pred_check_branch
          %366 = sbr.rel (%p364) target = $region56
        $region55: #{tpu_custom_call.1} parent=51 // pred_region
          %p367 = scmp.lt.s32.totalorder %s23, 1
          %s368 = scalar_select %p367, %s23, 1
          %s369 = smul.addr %s368, 8
          %s370 = scalar_lea.vmem %s2, %s369
        $region56: #{tpu_custom_call.1} parent=51 // pred_fallthru
          _
      $region52: #{tpu_custom_call.1} parent=5 // pred_fallthru
        _
    $region6: #{tpu_custom_call.1} parent=1 // loop_footer
      %s16 = sadd.s32 1, %s12
    $region7: #{tpu_custom_call.1} parent=1 // loop_footer_branch
      %11 = sbr.rel target = $region3
    $region8: #{tpu_custom_call.1} parent=1 // loop_exit
      _
    %371 = vsyncpa [#allocation6], 1
    %s372 = scalar_lea.sflag [#allocation6], 1
    %373 = vsyncpa %s372, 1
    %374 = vsyncpa [#allocation8], 1

</llo_original>
